<compile_context>
chip_gen: v6e
topology: v6e:2x2x1
jax: 0.10.0
libtpu: 0.0.40
codegen_flags: <defaults>
</compile_context>

<pallas_src>
import jax
import jax.numpy as jnp
import numpy as np
from jax import lax
from jax.experimental import pallas as pl
from jax.experimental.pallas import tpu as pltpu


def _round_up(x, m):
    return (x + m - 1) // m * m


def _rnn_recurrence_kernel(whh_ref, pre_ref, h_out_ref, h_acc):
    """One (batch-block, time-chunk) grid step of the serial recurrence.

    whh_ref  : (Hp, Hp)      W_hh^T, zero padded (constant index_map -> fetched once)
    pre_ref  : (Tc, Bb, Hp)  x @ W_ih^T + b for this time chunk (pipelined)
    h_out_ref: (Bb, Hp)      last hidden state for this batch block
    h_acc    : (Bb, Hp) f32  hidden-state carry across time chunks (VMEM scratch)
    """
    t = pl.program_id(1)

    @pl.when(t == 0)
    def _():
        h_acc[...] = jnp.zeros_like(h_acc)

    tc = pre_ref.shape[0]  # static

    def step(i, h):
        # Keep the W_hh read inside the body (no long-lived vreg pin); MXU
        # accumulates in f32 regardless of the operand dtype.
        hh = jnp.dot(h.astype(whh_ref.dtype), whh_ref[...],
                     preferred_element_type=jnp.float32)
        return jnp.tanh(pre_ref[i].astype(jnp.float32) + hh)

    h = lax.fori_loop(0, tc, step, h_acc[...], unroll=min(8, tc))
    h_acc[...] = h

    @pl.when(t == pl.num_programs(1) - 1)
    def _():
        h_out_ref[...] = h.astype(h_out_ref.dtype)


def rnn_model_forward(x, params, *, mxu_dtype=jnp.float32, time_chunk=None):
    """Equivalent of RNNModel.forward: out, _ = rnn(x); fc(out[:, -1, :])."""
    B, T, I = x.shape
    H = params["w_hh"].shape[0]
    f32 = jnp.float32

    Hp = _round_up(max(H, 128), 128)            # lane-aligned hidden size

    # --- batch blocking ------------------------------------------------------
    if B <= 8:
        Bb, nB = 8, 1
    else:
        # >= 2 sublane-aligned blocks so the "parallel" axis can shard across
        # v7x's two TensorCores; cap a block at 256 rows.
        Bb = min(256, _round_up((B + 1) // 2, 8))
        nB = pl.cdiv(B, Bb)
    Bp = Bb * nB

    # --- time chunking (bounds VMEM independently of T) ----------------------
    itemsize = jnp.dtype(mxu_dtype).itemsize
    if time_chunk is None:
        pre_buf_budget = 2 * 1024 * 1024        # bytes per pre buffer (x2 for double-buffer)
        time_chunk = max(1, pre_buf_budget // (Bb * Hp * itemsize))
    Tc = max(1, min(T, int(time_chunk)))
    Tp = _round_up(T, Tc)
    nT = Tp // Tc

    # --- hoisted input projection in XLA at the true K = I -------------------
    w_ih = params["w_ih"].astype(f32)                          # (H, I)
    bias = (params["b_ih"] + params["b_hh"]).astype(f32)       # (H,)
    pre = jnp.einsum("bti,hi->bth", x.astype(f32), w_ih) + bias  # (B, T, H)
    pre = jnp.transpose(pre, (1, 0, 2))                        # (T, B, H) time-major
    # FRONT-pad time with zeros (exact: h stays 0 through padded steps since
    # h0 = 0 and tanh(0) = 0); zero-pad batch/hidden (exact as well).
    pre = jnp.pad(pre, ((Tp - T, 0), (0, Bp - B), (0, Hp - H))).astype(mxu_dtype)

    whh = jnp.pad(params["w_hh"].T.astype(f32),
                  ((0, Hp - H), (0, Hp - H))).astype(mxu_dtype)  # (Hp, Hp) = W_hh^T

    vmem_bytes = (2 * Tc * Bb * Hp * itemsize      # pre chunk, double-buffered
                  + 2 * Hp * Hp * itemsize         # W_hh^T (conservative x2)
                  + 3 * Bb * Hp * 4)               # h_out (x2) + h_acc scratch
    vmem_limit = int(min(max(2 * vmem_bytes, 4 << 20), 48 << 20))

    h_last_p = pl.pallas_call(
        _rnn_recurrence_kernel,
        out_shape=jax.ShapeDtypeStruct((Bp, Hp), jnp.float32),
        grid=(nB, nT),
        in_specs=[
            pl.BlockSpec((Hp, Hp), lambda b, t: (0, 0)),         # W_hh^T (resident)
            pl.BlockSpec((Tc, Bb, Hp), lambda b, t: (t, b, 0)),  # pre (streamed)
        ],
        out_specs=pl.BlockSpec((Bb, Hp), lambda b, t: (b, 0)),
        scratch_shapes=[pltpu.VMEM((Bb, Hp), jnp.float32)],
        compiler_params=pltpu.CompilerParams(
            dimension_semantics=("parallel", "arbitrary"),
            vmem_limit_bytes=vmem_limit),
    )(whh, pre)

    h_last = h_last_p[:B, :H]
    # Final Linear(H -> 1) stays in XLA (N=1 matmul wastes the MXU; a (B, 1)
    # kernel output would force masked partial stores).
    return h_last @ params["w_fc"].T.astype(f32) + params["b_fc"].astype(f32)


def rnn_model_ref(x, params):
    """Pure-JAX reference of the same forward pass."""
    B = x.shape[0]
    H = params["w_hh"].shape[0]

    def step(h, x_t):
        h_new = jnp.tanh(x_t @ params["w_ih"].T + params["b_ih"]
                         + h @ params["w_hh"].T + params["b_hh"])
        return h_new, None

    h0 = jnp.zeros((B, H), jnp.float32)
    h_last, _ = lax.scan(step, h0, jnp.transpose(x, (1, 0, 2)))
    return h_last @ params["w_fc"].T + params["b_fc"]


def init_params(key, input_size, hidden_size):
    """Deterministic init matching nn.RNN / nn.Linear shapes (U(-1/sqrt(H), 1/sqrt(H)))."""
    ks = jax.random.split(key, 6)
    s = 1.0 / np.sqrt(hidden_size)
    u = lambda k, shape: jax.random.uniform(k, shape, jnp.float32, -s, s)
    return {
        "w_ih": u(ks[0], (hidden_size, input_size)),
        "w_hh": u(ks[1], (hidden_size, hidden_size)),
        "b_ih": u(ks[2], (hidden_size,)),
        "b_hh": u(ks[3], (hidden_size,)),
        "w_fc": u(ks[4], (1, hidden_size)),
        "b_fc": u(ks[5], (1,)),
    }


if __name__ == "__main__":
    key = jax.random.PRNGKey(0)
    kp, kx1, kx2 = jax.random.split(key, 3)

    # Toy shapes implied by the module: batch=2, seq=8, input=4, hidden=32.
    B, T, I, H = 2, 8, 4, 32
    params = init_params(kp, I, H)
    x = jax.random.normal(kx1, (B, T, I), jnp.float32)

    out = jax.block_until_ready(rnn_model_forward(x, params))
    ref = jax.block_until_ready(rnn_model_ref(x, params))
    assert out.shape == (B, 1)
    np.testing.assert_allclose(np.asarray(out), np.asarray(ref),
                               rtol=1e-5, atol=1e-5)

    # Exercise the batch-parallel grid (nB=2), the chunked/pipelined pre
    # stream (nT=3) and the zero front-padding of the time axis.
    B2, T2 = 20, 20
    x2 = jax.random.normal(kx2, (B2, T2, I), jnp.float32)
    out2 = jax.block_until_ready(rnn_model_forward(x2, params, time_chunk=8))
    ref2 = jax.block_until_ready(rnn_model_ref(x2, params))
    assert out2.shape == (B2, 1)
    np.testing.assert_allclose(np.asarray(out2), np.asarray(ref2),
                               rtol=1e-4, atol=1e-4)

    # bf16 MXU inputs / f32 accumulation (v6e/v7x fast path); looser tolerance
    # since the operands are rounded to bf16.
    out_bf16 = jax.block_until_ready(
        rnn_model_forward(x, params, mxu_dtype=jnp.bfloat16))
    np.testing.assert_allclose(np.asarray(out_bf16), np.asarray(ref),
                               rtol=5e-2, atol=5e-2)

    print("KERNEL_OK")
</pallas_src>

<mosaic_0001>
module attributes {stable_mosaic.version = 11 : i64} {
  func.func @_rnn_recurrence_kernel(%arg0: i32, %arg1: i32, %arg2: memref<128x128xf32, #tpu.memory_space<vmem>>, %arg3: memref<8x8x128xf32, #tpu.memory_space<vmem>>, %arg4: memref<8x128xf32, #tpu.memory_space<vmem>>, %arg5: memref<8x128xf32, #tpu.memory_space<vmem>>) attributes {dimension_semantics = [#tpu.dimension_semantics<parallel>, #tpu.dimension_semantics<arbitrary>], iteration_bounds = array<i64: 1, 1>, scalar_prefetch = 0 : i64, scratch_operands = 1 : i64, tpu.core_type = #tpu.core_type<tc>, window_params = [{pipeline_mode = #tpu.pipeline_mode<synchronous>, transform_indices = @transform_0, window_bounds = array<i64: 128, 128>}, {transform_indices = @transform_1, window_bounds = array<i64: 8, 8, 128>}, {transform_indices = @transform_2, window_bounds = array<i64: 8, 128>}]} {
    %c0_i32 = arith.constant 0 : i32
    %0 = arith.cmpi eq, %arg1, %c0_i32 : i32
    %1 = arith.extui %0 : i1 to i32
    %c0_i32_0 = arith.constant 0 : i32
    %2 = arith.cmpi ne, %1, %c0_i32_0 : i32
    scf.if %2 {
      %cst_46 = arith.constant 0.000000e+00 : f32
      %64 = vector.broadcast %cst_46 : f32 to vector<8x128xf32>
      %c0_47 = arith.constant 0 : index
      %c0_48 = arith.constant 0 : index
      %65 = vector.load %arg5[%c0_47, %c0_48] : memref<8x128xf32, #tpu.memory_space<vmem>>, vector<8x128xf32>
      tpu.vector_store %arg5[%c0_47, %c0_48], %64 {strides = array<i32>} : memref<8x128xf32, #tpu.memory_space<vmem>>, vector<8x128xf32>,
    } else {
    }
    %c0 = arith.constant 0 : index
    %c0_1 = arith.constant 0 : index
    %3 = vector.load %arg5[%c0, %c0_1] : memref<8x128xf32, #tpu.memory_space<vmem>>, vector<8x128xf32>
    %c0_i32_2 = arith.constant 0 : i32
    %c0_3 = arith.constant 0 : index
    %c0_4 = arith.constant 0 : index
    %4 = vector.load %arg2[%c0_3, %c0_4] : memref<128x128xf32, #tpu.memory_space<vmem>>, vector<128x128xf32>
    %cst = arith.constant dense<0.000000e+00> : vector<8x128xf32>
    %5 = tpu.matmul %3, %4, %cst {dimension_numbers = #tpu.dot_dimension_numbers<[1], [0], [0], [1], [0, 0, 1, 1], [], []>} : vector<8x128xf32>, vector<128x128xf32>, vector<8x128xf32> -> vector<8x128xf32>
    %6 = arith.index_cast %c0_i32_2 : i32 to index
    %c0_5 = arith.constant 0 : index
    %c0_6 = arith.constant 0 : index
    %7 = vector.load %arg3[%6, %c0_5, %c0_6] : memref<8x8x128xf32, #tpu.memory_space<vmem>>, vector<1x8x128xf32>
    %8 = vector.shape_cast %7 : vector<1x8x128xf32> to vector<8x128xf32>
    %9 = arith.addf %8, %5 : vector<8x128xf32>
    %10 = math.tanh %9 : vector<8x128xf32>
    %c1_i32 = arith.constant 1 : i32
    %c0_7 = arith.constant 0 : index
    %c0_8 = arith.constant 0 : index
    %11 = vector.load %arg2[%c0_7, %c0_8] : memref<128x128xf32, #tpu.memory_space<vmem>>, vector<128x128xf32>
    %cst_9 = arith.constant dense<0.000000e+00> : vector<8x128xf32>
    %12 = tpu.matmul %10, %11, %cst_9 {dimension_numbers = #tpu.dot_dimension_numbers<[1], [0], [0], [1], [0, 0, 1, 1], [], []>} : vector<8x128xf32>, vector<128x128xf32>, vector<8x128xf32> -> vector<8x128xf32>
    %13 = arith.index_cast %c1_i32 : i32 to index
    %c0_10 = arith.constant 0 : index
    %c0_11 = arith.constant 0 : index
    %14 = vector.load %arg3[%13, %c0_10, %c0_11] : memref<8x8x128xf32, #tpu.memory_space<vmem>>, vector<1x8x128xf32>
    %15 = vector.shape_cast %14 : vector<1x8x128xf32> to vector<8x128xf32>
    %16 = arith.addf %15, %12 : vector<8x128xf32>
    %17 = math.tanh %16 : vector<8x128xf32>
    %c2_i32 = arith.constant 2 : i32
    %c0_12 = arith.constant 0 : index
    %c0_13 = arith.constant 0 : index
    %18 = vector.load %arg2[%c0_12, %c0_13] : memref<128x128xf32, #tpu.memory_space<vmem>>, vector<128x128xf32>
    %cst_14 = arith.constant dense<0.000000e+00> : vector<8x128xf32>
    %19 = tpu.matmul %17, %18, %cst_14 {dimension_numbers = #tpu.dot_dimension_numbers<[1], [0], [0], [1], [0, 0, 1, 1], [], []>} : vector<8x128xf32>, vector<128x128xf32>, vector<8x128xf32> -> vector<8x128xf32>
    %20 = arith.index_cast %c2_i32 : i32 to index
    %c0_15 = arith.constant 0 : index
    %c0_16 = arith.constant 0 : index
    %21 = vector.load %arg3[%20, %c0_15, %c0_16] : memref<8x8x128xf32, #tpu.memory_space<vmem>>, vector<1x8x128xf32>
    %22 = vector.shape_cast %21 : vector<1x8x128xf32> to vector<8x128xf32>
    %23 = arith.addf %22, %19 : vector<8x128xf32>
    %24 = math.tanh %23 : vector<8x128xf32>
    %c3_i32 = arith.constant 3 : i32
    %c0_17 = arith.constant 0 : index
    %c0_18 = arith.constant 0 : index
    %25 = vector.load %arg2[%c0_17, %c0_18] : memref<128x128xf32, #tpu.memory_space<vmem>>, vector<128x128xf32>
    %cst_19 = arith.constant dense<0.000000e+00> : vector<8x128xf32>
    %26 = tpu.matmul %24, %25, %cst_19 {dimension_numbers = #tpu.dot_dimension_numbers<[1], [0], [0], [1], [0, 0, 1, 1], [], []>} : vector<8x128xf32>, vector<128x128xf32>, vector<8x128xf32> -> vector<8x128xf32>
    %27 = arith.index_cast %c3_i32 : i32 to index
    %c0_20 = arith.constant 0 : index
    %c0_21 = arith.constant 0 : index
    %28 = vector.load %arg3[%27, %c0_20, %c0_21] : memref<8x8x128xf32, #tpu.memory_space<vmem>>, vector<1x8x128xf32>
    %29 = vector.shape_cast %28 : vector<1x8x128xf32> to vector<8x128xf32>
    %30 = arith.addf %29, %26 : vector<8x128xf32>
    %31 = math.tanh %30 : vector<8x128xf32>
    %c4_i32 = arith.constant 4 : i32
    %c0_22 = arith.constant 0 : index
    %c0_23 = arith.constant 0 : index
    %32 = vector.load %arg2[%c0_22, %c0_23] : memref<128x128xf32, #tpu.memory_space<vmem>>, vector<128x128xf32>
    %cst_24 = arith.constant dense<0.000000e+00> : vector<8x128xf32>
    %33 = tpu.matmul %31, %32, %cst_24 {dimension_numbers = #tpu.dot_dimension_numbers<[1], [0], [0], [1], [0, 0, 1, 1], [], []>} : vector<8x128xf32>, vector<128x128xf32>, vector<8x128xf32> -> vector<8x128xf32>
    %34 = arith.index_cast %c4_i32 : i32 to index
    %c0_25 = arith.constant 0 : index
    %c0_26 = arith.constant 0 : index
    %35 = vector.load %arg3[%34, %c0_25, %c0_26] : memref<8x8x128xf32, #tpu.memory_space<vmem>>, vector<1x8x128xf32>
    %36 = vector.shape_cast %35 : vector<1x8x128xf32> to vector<8x128xf32>
    %37 = arith.addf %36, %33 : vector<8x128xf32>
    %38 = math.tanh %37 : vector<8x128xf32>
    %c5_i32 = arith.constant 5 : i32
    %c0_27 = arith.constant 0 : index
    %c0_28 = arith.constant 0 : index
    %39 = vector.load %arg2[%c0_27, %c0_28] : memref<128x128xf32, #tpu.memory_space<vmem>>, vector<128x128xf32>
    %cst_29 = arith.constant dense<0.000000e+00> : vector<8x128xf32>
    %40 = tpu.matmul %38, %39, %cst_29 {dimension_numbers = #tpu.dot_dimension_numbers<[1], [0], [0], [1], [0, 0, 1, 1], [], []>} : vector<8x128xf32>, vector<128x128xf32>, vector<8x128xf32> -> vector<8x128xf32>
    %41 = arith.index_cast %c5_i32 : i32 to index
    %c0_30 = arith.constant 0 : index
    %c0_31 = arith.constant 0 : index
    %42 = vector.load %arg3[%41, %c0_30, %c0_31] : memref<8x8x128xf32, #tpu.memory_space<vmem>>, vector<1x8x128xf32>
    %43 = vector.shape_cast %42 : vector<1x8x128xf32> to vector<8x128xf32>
    %44 = arith.addf %43, %40 : vector<8x128xf32>
    %45 = math.tanh %44 : vector<8x128xf32>
    %c6_i32 = arith.constant 6 : i32
    %c0_32 = arith.constant 0 : index
    %c0_33 = arith.constant 0 : index
    %46 = vector.load %arg2[%c0_32, %c0_33] : memref<128x128xf32, #tpu.memory_space<vmem>>, vector<128x128xf32>
    %cst_34 = arith.constant dense<0.000000e+00> : vector<8x128xf32>
    %47 = tpu.matmul %45, %46, %cst_34 {dimension_numbers = #tpu.dot_dimension_numbers<[1], [0], [0], [1], [0, 0, 1, 1], [], []>} : vector<8x128xf32>, vector<128x128xf32>, vector<8x128xf32> -> vector<8x128xf32>
    %48 = arith.index_cast %c6_i32 : i32 to index
    %c0_35 = arith.constant 0 : index
    %c0_36 = arith.constant 0 : index
    %49 = vector.load %arg3[%48, %c0_35, %c0_36] : memref<8x8x128xf32, #tpu.memory_space<vmem>>, vector<1x8x128xf32>
    %50 = vector.shape_cast %49 : vector<1x8x128xf32> to vector<8x128xf32>
    %51 = arith.addf %50, %47 : vector<8x128xf32>
    %52 = math.tanh %51 : vector<8x128xf32>
    %c7_i32 = arith.constant 7 : i32
    %c0_37 = arith.constant 0 : index
    %c0_38 = arith.constant 0 : index
    %53 = vector.load %arg2[%c0_37, %c0_38] : memref<128x128xf32, #tpu.memory_space<vmem>>, vector<128x128xf32>
    %cst_39 = arith.constant dense<0.000000e+00> : vector<8x128xf32>
    %54 = tpu.matmul %52, %53, %cst_39 {dimension_numbers = #tpu.dot_dimension_numbers<[1], [0], [0], [1], [0, 0, 1, 1], [], []>} : vector<8x128xf32>, vector<128x128xf32>, vector<8x128xf32> -> vector<8x128xf32>
    %55 = arith.index_cast %c7_i32 : i32 to index
    %c0_40 = arith.constant 0 : index
    %c0_41 = arith.constant 0 : index
    %56 = vector.load %arg3[%55, %c0_40, %c0_41] : memref<8x8x128xf32, #tpu.memory_space<vmem>>, vector<1x8x128xf32>
    %57 = vector.shape_cast %56 : vector<1x8x128xf32> to vector<8x128xf32>
    %58 = arith.addf %57, %54 : vector<8x128xf32>
    %59 = math.tanh %58 : vector<8x128xf32>
    %c8_i32 = arith.constant 8 : i32
    %c0_42 = arith.constant 0 : index
    %c0_43 = arith.constant 0 : index
    %60 = vector.load %arg5[%c0_42, %c0_43] : memref<8x128xf32, #tpu.memory_space<vmem>>, vector<8x128xf32>
    tpu.vector_store %arg5[%c0_42, %c0_43], %59 {strides = array<i32>} : memref<8x128xf32, #tpu.memory_space<vmem>>, vector<8x128xf32>,
    %c0_i32_44 = arith.constant 0 : i32
    %61 = arith.cmpi eq, %arg1, %c0_i32_44 : i32
    %62 = arith.extui %61 : i1 to i32
    %c0_i32_45 = arith.constant 0 : i32
    %63 = arith.cmpi ne, %62, %c0_i32_45 : i32
    scf.if %63 {
      %c0_46 = arith.constant 0 : index
      %c0_47 = arith.constant 0 : index
      %64 = vector.load %arg4[%c0_46, %c0_47] : memref<8x128xf32, #tpu.memory_space<vmem>>, vector<8x128xf32>
      tpu.vector_store %arg4[%c0_46, %c0_47], %59 {strides = array<i32>} : memref<8x128xf32, #tpu.memory_space<vmem>>, vector<8x128xf32>,
    } else {
    }
    return
  }
  func.func @transform_0(%arg0: i32, %arg1: i32) -> (i32, i32) {
    %c0_i32 = arith.constant 0 : i32
    %c0_i32_0 = arith.constant 0 : i32
    %c0_i32_1 = arith.constant 0 : i32
    return %c0_i32, %c0_i32_0 : i32, i32
  }
  func.func @transform_1(%arg0: i32, %arg1: i32) -> (i32, i32, i32) {
    %c0_i32 = arith.constant 0 : i32
    %c0_i32_0 = arith.constant 0 : i32
    return %arg1, %arg0, %c0_i32 : i32, i32, i32
  }
  func.func @transform_2(%arg0: i32, %arg1: i32) -> (i32, i32) {
    %c0_i32 = arith.constant 0 : i32
    %c0_i32_0 = arith.constant 0 : i32
    return %arg0, %c0_i32 : i32, i32
  }
}

</mosaic_0001>

<llo_original>
// kernel: tpu_custom_call.1
$region0: #{tpu_custom_call.1}
  #allocation0 [shape = 'u32[]', space=smem, size = 0x4, offset = 0x4, fixed_abs, tag = 'smem constant byte address 0x4 - core index']
  #allocation1 [shape = 'u32[144,128]{1,0:T(1,128)}', space=vmem, size = 0x12000, scoped, tag = 'internal scratch']
  #allocation2 [shape = 'f32[8,128]{1,0:T(8,128)}', space=vmem, size = 0x1000, scoped, tag = 'scratch operand']
  %s0 = inlined_call_operand.hbm [shape: f32[128,128], index: 0, kind: input, shape index: {}]
  %s1 = inlined_call_operand.hbm [shape: f32[8,8,128], index: 1, kind: input, shape index: {}]
  %s2 = inlined_call_operand.hbm [shape: f32[8,128], index: 2, kind: output, shape index: {}]
  %s3 = sld [smem:[#allocation0]]
  $region34: #{tpu_custom_call.1} parent=0
    _
  %s5 = ssub.s32 1, %s3
  %s6 = scalar_select 0, %s5, %s3
  $region1: #{tpu_custom_call.1} parent=0
    #allocation3 [shape = 'u8[65536]{0}', space=vmem, size = 0x10000, scoped, tag = 'input window, operand 0, single buffered']
    #allocation4 [shape = 's32[1]{0}', space=sflag, size = 0x4, scoped, tag = 'scoped memory for tpu_custom_call.1']
    #allocation5 [shape = 's32[1]{0}', space=sflag, size = 0x4, scoped, tag = 'scoped memory for tpu_custom_call.1']
    #allocation6 [shape = 'u8[32768]{0}', space=vmem, size = 0x8000, scoped, tag = 'input window, operand 1, single buffered']
    #allocation7 [shape = 's32[1]{0}', space=sflag, size = 0x4, scoped, tag = 'scoped memory for tpu_custom_call.1']
    #allocation8 [shape = 'u8[4096]{0}', space=vmem, size = 0x1000, scoped, tag = 'output window, operand 0, single buffered']
    %7 = vsyncpa [#allocation4], 0
    %8 = vsyncpa [#allocation7], 0
    %9 = vsyncpa [#allocation5], 0
    // Predicated region
    $region2: #{tpu_custom_call.1} parent=1 // pred_check
      _
    $region3: #{tpu_custom_call.1} parent=1 // pred_check_branch
      %11 = sbr.rel (0) target = $region5
    $region4: #{tpu_custom_call.1} parent=1 // pred_region
      %s13 = ssub.s32 2048, 2048
      %14 = vsyncadd [#allocation4], %s13
      %s15 = sshll.u32 [#allocation3], 4
      %s16 = int_to_ptr.vmem [resolvable:$true] %s15
      %21 = dma.hbm_to_vmem [thread:$0]  %s0, 2048, %s16, [#allocation4], 128, 128, 8
    $region5: #{tpu_custom_call.1} parent=1 // pred_fallthru
      _
    // Predicated region
    $region6: #{tpu_custom_call.1} parent=1 // pred_check
      _
    $region7: #{tpu_custom_call.1} parent=1 // pred_check_branch
      %23 = sbr.rel (0) target = $region9
    $region8: #{tpu_custom_call.1} parent=1 // pred_region
      %s25 = ssub.s32 1024, 1024
      %26 = vsyncadd [#allocation7], %s25
      %s27 = sshll.u32 [#allocation6], 4
      %s28 = int_to_ptr.vmem [resolvable:$true] %s27
      %33 = dma.hbm_to_vmem [thread:$0]  %s1, 1024, %s28, [#allocation7], 128, 128, 8
    $region9: #{tpu_custom_call.1} parent=1 // pred_fallthru
      _
    // Predicated region
    $region10: #{tpu_custom_call.1} parent=1 // pred_check
      _
    $region11: #{tpu_custom_call.1} parent=1 // pred_check_branch
      %35 = sbr.rel (0) target = $region13
    $region12: #{tpu_custom_call.1} parent=1 // pred_region
      %36 = dma.done [#allocation4], 2048
    $region13: #{tpu_custom_call.1} parent=1 // pred_fallthru
      _
    // Predicated region
    $region14: #{tpu_custom_call.1} parent=1 // pred_check
      _
    $region15: #{tpu_custom_call.1} parent=1 // pred_check_branch
      %38 = sbr.rel (0) target = $region17
    $region16: #{tpu_custom_call.1} parent=1 // pred_region
      %39 = dma.done [#allocation7], 1024
    $region17: #{tpu_custom_call.1} parent=1 // pred_fallthru
      _
    %p40 = scmp.eq.s32.totalorder 0, 0
    // Predicated region
    $region18: #{tpu_custom_call.1} parent=1 // pred_check
      %p41 = pneg %p40
    $region19: #{tpu_custom_call.1} parent=1 // pred_check_branch
      %43 = sbr.rel (%p41) target = $region21
    $region20: #{tpu_custom_call.1} parent=1 // pred_region
      %44 = vst [vmem:[#allocation2] sm:$0xff] 0.0
    $region21: #{tpu_custom_call.1} parent=1 // pred_fallthru
      _
    %v45 = vld [vmem:[#allocation2] sm:$0xff]
    %v46 = vld [vmem:[#allocation3] sm:$0xff]
    %v47 = vld [vmem:[#allocation3 + $0x8] sm:$0xff]
    %v48 = vld [vmem:[#allocation3 + $0x10] sm:$0xff]
    %v49 = vld [vmem:[#allocation3 + $0x18] sm:$0xff]
    %v50 = vld [vmem:[#allocation3 + $0x20] sm:$0xff]
    %v51 = vld [vmem:[#allocation3 + $0x28] sm:$0xff]
    %v52 = vld [vmem:[#allocation3 + $0x30] sm:$0xff]
    %v53 = vld [vmem:[#allocation3 + $0x38] sm:$0xff]
    %v54 = vld [vmem:[#allocation3 + $0x40] sm:$0xff]
    %v55 = vld [vmem:[#allocation3 + $0x48] sm:$0xff]
    %v56 = vld [vmem:[#allocation3 + $0x50] sm:$0xff]
    %v57 = vld [vmem:[#allocation3 + $0x58] sm:$0xff]
    %v58 = vld [vmem:[#allocation3 + $0x60] sm:$0xff]
    %v59 = vld [vmem:[#allocation3 + $0x68] sm:$0xff]
    %v60 = vld [vmem:[#allocation3 + $0x70] sm:$0xff]
    %v61 = vld [vmem:[#allocation3 + $0x78] sm:$0xff]
    %62 = vmatprep.subr.mxu0 0.0
    %63 = vmatpush1.msra.mxu0 %v61
    %64 = vmatprep.subr.mxu0 0.0
    %65 = vmatpush1.msra.mxu0 %v60
    %66 = vmatprep.subr.mxu0 0.0
    %67 = vmatpush1.msra.mxu0 %v59
    %68 = vmatprep.subr.mxu0 0.0
    %69 = vmatpush1.msra.mxu0 %v58
    %70 = vmatprep.subr.mxu0 0.0
    %71 = vmatpush1.msra.mxu0 %v57
    %72 = vmatprep.subr.mxu0 0.0
    %73 = vmatpush1.msra.mxu0 %v56
    %74 = vmatprep.subr.mxu0 0.0
    %75 = vmatpush1.msra.mxu0 %v55
    %76 = vmatprep.subr.mxu0 0.0
    %77 = vmatpush1.msra.mxu0 %v54
    %78 = vmatprep.subr.mxu0 0.0
    %79 = vmatpush1.msra.mxu0 %v53
    %80 = vmatprep.subr.mxu0 0.0
    %81 = vmatpush1.msra.mxu0 %v52
    %82 = vmatprep.subr.mxu0 0.0
    %83 = vmatpush1.msra.mxu0 %v51
    %84 = vmatprep.subr.mxu0 0.0
    %85 = vmatpush1.msra.mxu0 %v50
    %86 = vmatprep.subr.mxu0 0.0
    %87 = vmatpush1.msra.mxu0 %v49
    %88 = vmatprep.subr.mxu0 0.0
    %89 = vmatpush1.msra.mxu0 %v48
    %90 = vmatprep.subr.mxu0 0.0
    %91 = vmatpush1.msra.mxu0 %v47
    %92 = vmatprep.subr.mxu0 0.0
    %93 = vmatpush1.msra.mxu0 %v46
    %94 = vmatprep.subr.mxu0 0.0
    %95 = vmatpush2.msra.mxu0 0.0
    %96 = vmatprep.subr.mxu0 0.0
    %97 = vmatpush2.msra.mxu0 0.0
    %98 = vmatprep.subr.mxu0 0.0
    %99 = vmatpush2.msra.mxu0 0.0
    %100 = vmatprep.subr.mxu0 0.0
    %101 = vmatpush2.msra.mxu0 0.0
    %102 = vmatprep.subr.mxu0 0.0
    %103 = vmatpush2.msra.mxu0 0.0
    %104 = vmatprep.subr.mxu0 0.0
    %105 = vmatpush2.msra.mxu0 0.0
    %106 = vmatprep.subr.mxu0 0.0
    %107 = vmatpush2.msra.mxu0 0.0
    %108 = vmatprep.subr.mxu0 0.0
    %109 = vmatpush2.msra.mxu0 0.0
    %110 = vmatprep.subr.mxu0 0.0
    %111 = vmatpush2.msra.mxu0 0.0
    %112 = vmatprep.subr.mxu0 0.0
    %113 = vmatpush2.msra.mxu0 0.0
    %114 = vmatprep.subr.mxu0 0.0
    %115 = vmatpush2.msra.mxu0 0.0
    %116 = vmatprep.subr.mxu0 0.0
    %117 = vmatpush2.msra.mxu0 0.0
    %118 = vmatprep.subr.mxu0 0.0
    %119 = vmatpush2.msra.mxu0 0.0
    %120 = vmatprep.subr.mxu0 0.0
    %121 = vmatpush2.msra.mxu0 0.0
    %122 = vmatprep.subr.mxu0 0.0
    %123 = vmatpush2.msra.mxu0 0.0
    %124 = vmatprep.subr.mxu0 0.0
    %125 = vmatpush2.msra.mxu0 0.0
    %126 = vmatprep.mubr.f32.mxu0 0.0
    %127 = vmatmul.mubr.f32.gmra.mxu0 %v45
    %v128 = vpop.f32.mrf.mxu0
    %v129 = vadd.f32 0.0, %v128
    %v130 = vpop.f32.mrf.mxu0
    %131 = vdwg.mxu0
    %v132 = vld [vmem:[#allocation6] sm:$0xff]
    %v133 = vadd.f32 %v132, %v129
    %v134 = vtanh.pop %v133
    %135 = vmatprep.subr.mxu0 0.0
    %136 = vmatpush1.msra.mxu0 %v61
    %137 = vmatprep.subr.mxu0 0.0
    %138 = vmatpush1.msra.mxu0 %v60
    %139 = vmatprep.subr.mxu0 0.0
    %140 = vmatpush1.msra.mxu0 %v59
    %141 = vmatprep.subr.mxu0 0.0
    %142 = vmatpush1.msra.mxu0 %v58
    %143 = vmatprep.subr.mxu0 0.0
    %144 = vmatpush1.msra.mxu0 %v57
    %145 = vmatprep.subr.mxu0 0.0
    %146 = vmatpush1.msra.mxu0 %v56
    %147 = vmatprep.subr.mxu0 0.0
    %148 = vmatpush1.msra.mxu0 %v55
    %149 = vmatprep.subr.mxu0 0.0
    %150 = vmatpush1.msra.mxu0 %v54
    %151 = vmatprep.subr.mxu0 0.0
    %152 = vmatpush1.msra.mxu0 %v53
    %153 = vmatprep.subr.mxu0 0.0
    %154 = vmatpush1.msra.mxu0 %v52
    %155 = vmatprep.subr.mxu0 0.0
    %156 = vmatpush1.msra.mxu0 %v51
    %157 = vmatprep.subr.mxu0 0.0
    %158 = vmatpush1.msra.mxu0 %v50
    %159 = vmatprep.subr.mxu0 0.0
    %160 = vmatpush1.msra.mxu0 %v49
    %161 = vmatprep.subr.mxu0 0.0
    %162 = vmatpush1.msra.mxu0 %v48
    %163 = vmatprep.subr.mxu0 0.0
    %164 = vmatpush1.msra.mxu0 %v47
    %165 = vmatprep.subr.mxu0 0.0
    %166 = vmatpush1.msra.mxu0 %v46
    %167 = vmatprep.subr.mxu0 0.0
    %168 = vmatpush2.msra.mxu0 0.0
    %169 = vmatprep.subr.mxu0 0.0
    %170 = vmatpush2.msra.mxu0 0.0
    %171 = vmatprep.subr.mxu0 0.0
    %172 = vmatpush2.msra.mxu0 0.0
    %173 = vmatprep.subr.mxu0 0.0
    %174 = vmatpush2.msra.mxu0 0.0
    %175 = vmatprep.subr.mxu0 0.0
    %176 = vmatpush2.msra.mxu0 0.0
    %177 = vmatprep.subr.mxu0 0.0
    %178 = vmatpush2.msra.mxu0 0.0
    %179 = vmatprep.subr.mxu0 0.0
    %180 = vmatpush2.msra.mxu0 0.0
    %181 = vmatprep.subr.mxu0 0.0
    %182 = vmatpush2.msra.mxu0 0.0
    %183 = vmatprep.subr.mxu0 0.0
    %184 = vmatpush2.msra.mxu0 0.0
    %185 = vmatprep.subr.mxu0 0.0
    %186 = vmatpush2.msra.mxu0 0.0
    %187 = vmatprep.subr.mxu0 0.0
    %188 = vmatpush2.msra.mxu0 0.0
    %189 = vmatprep.subr.mxu0 0.0
    %190 = vmatpush2.msra.mxu0 0.0
    %191 = vmatprep.subr.mxu0 0.0
    %192 = vmatpush2.msra.mxu0 0.0
    %193 = vmatprep.subr.mxu0 0.0
    %194 = vmatpush2.msra.mxu0 0.0
    %195 = vmatprep.subr.mxu0 0.0
    %196 = vmatpush2.msra.mxu0 0.0
    %197 = vmatprep.subr.mxu0 0.0
    %198 = vmatpush2.msra.mxu0 0.0
    %199 = vmatprep.mubr.f32.mxu0 0.0
    %200 = vmatmul.mubr.f32.gmra.mxu0 %v134
    %v201 = vpop.f32.mrf.mxu0
    %v202 = vadd.f32 0.0, %v201
    %v203 = vpop.f32.mrf.mxu0
    %204 = vdwg.mxu0
    %s205 = scalar_lea.vmem [#allocation6], 8
    %v206 = vld [vmem:[%s205] sm:$0xff]
    %v207 = vadd.f32 %v206, %v202
    %v208 = vtanh.pop %v207
    %209 = vmatprep.subr.mxu0 0.0
    %210 = vmatpush1.msra.mxu0 %v61
    %211 = vmatprep.subr.mxu0 0.0
    %212 = vmatpush1.msra.mxu0 %v60
    %213 = vmatprep.subr.mxu0 0.0
    %214 = vmatpush1.msra.mxu0 %v59
    %215 = vmatprep.subr.mxu0 0.0
    %216 = vmatpush1.msra.mxu0 %v58
    %217 = vmatprep.subr.mxu0 0.0
    %218 = vmatpush1.msra.mxu0 %v57
    %219 = vmatprep.subr.mxu0 0.0
    %220 = vmatpush1.msra.mxu0 %v56
    %221 = vmatprep.subr.mxu0 0.0
    %222 = vmatpush1.msra.mxu0 %v55
    %223 = vmatprep.subr.mxu0 0.0
    %224 = vmatpush1.msra.mxu0 %v54
    %225 = vmatprep.subr.mxu0 0.0
    %226 = vmatpush1.msra.mxu0 %v53
    %227 = vmatprep.subr.mxu0 0.0
    %228 = vmatpush1.msra.mxu0 %v52
    %229 = vmatprep.subr.mxu0 0.0
    %230 = vmatpush1.msra.mxu0 %v51
    %231 = vmatprep.subr.mxu0 0.0
    %232 = vmatpush1.msra.mxu0 %v50
    %233 = vmatprep.subr.mxu0 0.0
    %234 = vmatpush1.msra.mxu0 %v49
    %235 = vmatprep.subr.mxu0 0.0
    %236 = vmatpush1.msra.mxu0 %v48
    %237 = vmatprep.subr.mxu0 0.0
    %238 = vmatpush1.msra.mxu0 %v47
    %239 = vmatprep.subr.mxu0 0.0
    %240 = vmatpush1.msra.mxu0 %v46
    %241 = vmatprep.subr.mxu0 0.0
    %242 = vmatpush2.msra.mxu0 0.0
    %243 = vmatprep.subr.mxu0 0.0
    %244 = vmatpush2.msra.mxu0 0.0
    %245 = vmatprep.subr.mxu0 0.0
    %246 = vmatpush2.msra.mxu0 0.0
    %247 = vmatprep.subr.mxu0 0.0
    %248 = vmatpush2.msra.mxu0 0.0
    %249 = vmatprep.subr.mxu0 0.0
    %250 = vmatpush2.msra.mxu0 0.0
    %251 = vmatprep.subr.mxu0 0.0
    %252 = vmatpush2.msra.mxu0 0.0
    %253 = vmatprep.subr.mxu0 0.0
    %254 = vmatpush2.msra.mxu0 0.0
    %255 = vmatprep.subr.mxu0 0.0
    %256 = vmatpush2.msra.mxu0 0.0
    %257 = vmatprep.subr.mxu0 0.0
    %258 = vmatpush2.msra.mxu0 0.0
    %259 = vmatprep.subr.mxu0 0.0
    %260 = vmatpush2.msra.mxu0 0.0
    %261 = vmatprep.subr.mxu0 0.0
    %262 = vmatpush2.msra.mxu0 0.0
    %263 = vmatprep.subr.mxu0 0.0
    %264 = vmatpush2.msra.mxu0 0.0
    %265 = vmatprep.subr.mxu0 0.0
    %266 = vmatpush2.msra.mxu0 0.0
    %267 = vmatprep.subr.mxu0 0.0
    %268 = vmatpush2.msra.mxu0 0.0
    %269 = vmatprep.subr.mxu0 0.0
    %270 = vmatpush2.msra.mxu0 0.0
    %271 = vmatprep.subr.mxu0 0.0
    %272 = vmatpush2.msra.mxu0 0.0
    %273 = vmatprep.mubr.f32.mxu0 0.0
    %274 = vmatmul.mubr.f32.gmra.mxu0 %v208
    %v275 = vpop.f32.mrf.mxu0
    %v276 = vadd.f32 0.0, %v275
    %v277 = vpop.f32.mrf.mxu0
    %278 = vdwg.mxu0
    %s279 = scalar_lea.vmem [#allocation6], 16
    %v280 = vld [vmem:[%s279] sm:$0xff]
    %v281 = vadd.f32 %v280, %v276
    %v282 = vtanh.pop %v281
    %283 = vmatprep.subr.mxu0 0.0
    %284 = vmatpush1.msra.mxu0 %v61
    %285 = vmatprep.subr.mxu0 0.0
    %286 = vmatpush1.msra.mxu0 %v60
    %287 = vmatprep.subr.mxu0 0.0
    %288 = vmatpush1.msra.mxu0 %v59
    %289 = vmatprep.subr.mxu0 0.0
    %290 = vmatpush1.msra.mxu0 %v58
    %291 = vmatprep.subr.mxu0 0.0
    %292 = vmatpush1.msra.mxu0 %v57
    %293 = vmatprep.subr.mxu0 0.0
    %294 = vmatpush1.msra.mxu0 %v56
    %295 = vmatprep.subr.mxu0 0.0
    %296 = vmatpush1.msra.mxu0 %v55
    %297 = vmatprep.subr.mxu0 0.0
    %298 = vmatpush1.msra.mxu0 %v54
    %299 = vmatprep.subr.mxu0 0.0
    %300 = vmatpush1.msra.mxu0 %v53
    %301 = vmatprep.subr.mxu0 0.0
    %302 = vmatpush1.msra.mxu0 %v52
    %303 = vmatprep.subr.mxu0 0.0
    %304 = vmatpush1.msra.mxu0 %v51
    %305 = vmatprep.subr.mxu0 0.0
    %306 = vmatpush1.msra.mxu0 %v50
    %307 = vmatprep.subr.mxu0 0.0
    %308 = vmatpush1.msra.mxu0 %v49
    %309 = vmatprep.subr.mxu0 0.0
    %310 = vmatpush1.msra.mxu0 %v48
    %311 = vmatprep.subr.mxu0 0.0
    %312 = vmatpush1.msra.mxu0 %v47
    %313 = vmatprep.subr.mxu0 0.0
    %314 = vmatpush1.msra.mxu0 %v46
    %315 = vmatprep.subr.mxu0 0.0
    %316 = vmatpush2.msra.mxu0 0.0
    %317 = vmatprep.subr.mxu0 0.0
    %318 = vmatpush2.msra.mxu0 0.0
    %319 = vmatprep.subr.mxu0 0.0
    %320 = vmatpush2.msra.mxu0 0.0
    %321 = vmatprep.subr.mxu0 0.0
    %322 = vmatpush2.msra.mxu0 0.0
    %323 = vmatprep.subr.mxu0 0.0
    %324 = vmatpush2.msra.mxu0 0.0
    %325 = vmatprep.subr.mxu0 0.0
    %326 = vmatpush2.msra.mxu0 0.0
    %327 = vmatprep.subr.mxu0 0.0
    %328 = vmatpush2.msra.mxu0 0.0
    %329 = vmatprep.subr.mxu0 0.0
    %330 = vmatpush2.msra.mxu0 0.0
    %331 = vmatprep.subr.mxu0 0.0
    %332 = vmatpush2.msra.mxu0 0.0
    %333 = vmatprep.subr.mxu0 0.0
    %334 = vmatpush2.msra.mxu0 0.0
    %335 = vmatprep.subr.mxu0 0.0
    %336 = vmatpush2.msra.mxu0 0.0
    %337 = vmatprep.subr.mxu0 0.0
    %338 = vmatpush2.msra.mxu0 0.0
    %339 = vmatprep.subr.mxu0 0.0
    %340 = vmatpush2.msra.mxu0 0.0
    %341 = vmatprep.subr.mxu0 0.0
    %342 = vmatpush2.msra.mxu0 0.0
    %343 = vmatprep.subr.mxu0 0.0
    %344 = vmatpush2.msra.mxu0 0.0
    %345 = vmatprep.subr.mxu0 0.0
    %346 = vmatpush2.msra.mxu0 0.0
    %347 = vmatprep.mubr.f32.mxu0 0.0
    %348 = vmatmul.mubr.f32.gmra.mxu0 %v282
    %v349 = vpop.f32.mrf.mxu0
    %v350 = vadd.f32 0.0, %v349
    %v351 = vpop.f32.mrf.mxu0
    %352 = vdwg.mxu0
    %s353 = scalar_lea.vmem [#allocation6], 24
    %v354 = vld [vmem:[%s353] sm:$0xff]
    %v355 = vadd.f32 %v354, %v350
    %v356 = vtanh.pop %v355
    %357 = vmatprep.subr.mxu0 0.0
    %358 = vmatpush1.msra.mxu0 %v61
    %359 = vmatprep.subr.mxu0 0.0
    %360 = vmatpush1.msra.mxu0 %v60
    %361 = vmatprep.subr.mxu0 0.0
    %362 = vmatpush1.msra.mxu0 %v59
    %363 = vmatprep.subr.mxu0 0.0
    %364 = vmatpush1.msra.mxu0 %v58
    %365 = vmatprep.subr.mxu0 0.0
    %366 = vmatpush1.msra.mxu0 %v57
    %367 = vmatprep.subr.mxu0 0.0
    %368 = vmatpush1.msra.mxu0 %v56
    %369 = vmatprep.subr.mxu0 0.0
    %370 = vmatpush1.msra.mxu0 %v55
    %371 = vmatprep.subr.mxu0 0.0
    %372 = vmatpush1.msra.mxu0 %v54
    %373 = vmatprep.subr.mxu0 0.0
    %374 = vmatpush1.msra.mxu0 %v53
    %375 = vmatprep.subr.mxu0 0.0
    %376 = vmatpush1.msra.mxu0 %v52
    %377 = vmatprep.subr.mxu0 0.0
    %378 = vmatpush1.msra.mxu0 %v51
    %379 = vmatprep.subr.mxu0 0.0
    %380 = vmatpush1.msra.mxu0 %v50
    %381 = vmatprep.subr.mxu0 0.0
    %382 = vmatpush1.msra.mxu0 %v49
    %383 = vmatprep.subr.mxu0 0.0
    %384 = vmatpush1.msra.mxu0 %v48
    %385 = vmatprep.subr.mxu0 0.0
    %386 = vmatpush1.msra.mxu0 %v47
    %387 = vmatprep.subr.mxu0 0.0
    %388 = vmatpush1.msra.mxu0 %v46
    %389 = vmatprep.subr.mxu0 0.0
    %390 = vmatpush2.msra.mxu0 0.0
    %391 = vmatprep.subr.mxu0 0.0
    %392 = vmatpush2.msra.mxu0 0.0
    %393 = vmatprep.subr.mxu0 0.0
    %394 = vmatpush2.msra.mxu0 0.0
    %395 = vmatprep.subr.mxu0 0.0
    %396 = vmatpush2.msra.mxu0 0.0
    %397 = vmatprep.subr.mxu0 0.0
    %398 = vmatpush2.msra.mxu0 0.0
    %399 = vmatprep.subr.mxu0 0.0
    %400 = vmatpush2.msra.mxu0 0.0
    %401 = vmatprep.subr.mxu0 0.0
    %402 = vmatpush2.msra.mxu0 0.0
    %403 = vmatprep.subr.mxu0 0.0
    %404 = vmatpush2.msra.mxu0 0.0
    %405 = vmatprep.subr.mxu0 0.0
    %406 = vmatpush2.msra.mxu0 0.0
    %407 = vmatprep.subr.mxu0 0.0
    %408 = vmatpush2.msra.mxu0 0.0
    %409 = vmatprep.subr.mxu0 0.0
    %410 = vmatpush2.msra.mxu0 0.0
    %411 = vmatprep.subr.mxu0 0.0
    %412 = vmatpush2.msra.mxu0 0.0
    %413 = vmatprep.subr.mxu0 0.0
    %414 = vmatpush2.msra.mxu0 0.0
    %415 = vmatprep.subr.mxu0 0.0
    %416 = vmatpush2.msra.mxu0 0.0
    %417 = vmatprep.subr.mxu0 0.0
    %418 = vmatpush2.msra.mxu0 0.0
    %419 = vmatprep.subr.mxu0 0.0
    %420 = vmatpush2.msra.mxu0 0.0
    %421 = vmatprep.mubr.f32.mxu0 0.0
    %422 = vmatmul.mubr.f32.gmra.mxu0 %v356
    %v423 = vpop.f32.mrf.mxu0
    %v424 = vadd.f32 0.0, %v423
    %v425 = vpop.f32.mrf.mxu0
    %426 = vdwg.mxu0
    %s427 = scalar_lea.vmem [#allocation6], 32
    %v428 = vld [vmem:[%s427] sm:$0xff]
    %v429 = vadd.f32 %v428, %v424
    %v430 = vtanh.pop %v429
    %431 = vmatprep.subr.mxu0 0.0
    %432 = vmatpush1.msra.mxu0 %v61
    %433 = vmatprep.subr.mxu0 0.0
    %434 = vmatpush1.msra.mxu0 %v60
    %435 = vmatprep.subr.mxu0 0.0
    %436 = vmatpush1.msra.mxu0 %v59
    %437 = vmatprep.subr.mxu0 0.0
    %438 = vmatpush1.msra.mxu0 %v58
    %439 = vmatprep.subr.mxu0 0.0
    %440 = vmatpush1.msra.mxu0 %v57
    %441 = vmatprep.subr.mxu0 0.0
    %442 = vmatpush1.msra.mxu0 %v56
    %443 = vmatprep.subr.mxu0 0.0
    %444 = vmatpush1.msra.mxu0 %v55
    %445 = vmatprep.subr.mxu0 0.0
    %446 = vmatpush1.msra.mxu0 %v54
    %447 = vmatprep.subr.mxu0 0.0
    %448 = vmatpush1.msra.mxu0 %v53
    %449 = vmatprep.subr.mxu0 0.0
    %450 = vmatpush1.msra.mxu0 %v52
    %451 = vmatprep.subr.mxu0 0.0
    %452 = vmatpush1.msra.mxu0 %v51
    %453 = vmatprep.subr.mxu0 0.0
    %454 = vmatpush1.msra.mxu0 %v50
    %455 = vmatprep.subr.mxu0 0.0
    %456 = vmatpush1.msra.mxu0 %v49
    %457 = vmatprep.subr.mxu0 0.0
    %458 = vmatpush1.msra.mxu0 %v48
    %459 = vmatprep.subr.mxu0 0.0
    %460 = vmatpush1.msra.mxu0 %v47
    %461 = vmatprep.subr.mxu0 0.0
    %462 = vmatpush1.msra.mxu0 %v46
    %463 = vmatprep.subr.mxu0 0.0
    %464 = vmatpush2.msra.mxu0 0.0
    %465 = vmatprep.subr.mxu0 0.0
    %466 = vmatpush2.msra.mxu0 0.0
    %467 = vmatprep.subr.mxu0 0.0
    %468 = vmatpush2.msra.mxu0 0.0
    %469 = vmatprep.subr.mxu0 0.0
    %470 = vmatpush2.msra.mxu0 0.0
    %471 = vmatprep.subr.mxu0 0.0
    %472 = vmatpush2.msra.mxu0 0.0
    %473 = vmatprep.subr.mxu0 0.0
    %474 = vmatpush2.msra.mxu0 0.0
    %475 = vmatprep.subr.mxu0 0.0
    %476 = vmatpush2.msra.mxu0 0.0
    %477 = vmatprep.subr.mxu0 0.0
    %478 = vmatpush2.msra.mxu0 0.0
    %479 = vmatprep.subr.mxu0 0.0
    %480 = vmatpush2.msra.mxu0 0.0
    %481 = vmatprep.subr.mxu0 0.0
    %482 = vmatpush2.msra.mxu0 0.0
    %483 = vmatprep.subr.mxu0 0.0
    %484 = vmatpush2.msra.mxu0 0.0
    %485 = vmatprep.subr.mxu0 0.0
    %486 = vmatpush2.msra.mxu0 0.0
    %487 = vmatprep.subr.mxu0 0.0
    %488 = vmatpush2.msra.mxu0 0.0
    %489 = vmatprep.subr.mxu0 0.0
    %490 = vmatpush2.msra.mxu0 0.0
    %491 = vmatprep.subr.mxu0 0.0
    %492 = vmatpush2.msra.mxu0 0.0
    %493 = vmatprep.subr.mxu0 0.0
    %494 = vmatpush2.msra.mxu0 0.0
    %495 = vmatprep.mubr.f32.mxu0 0.0
    %496 = vmatmul.mubr.f32.gmra.mxu0 %v430
    %v497 = vpop.f32.mrf.mxu0
    %v498 = vadd.f32 0.0, %v497
    %v499 = vpop.f32.mrf.mxu0
    %500 = vdwg.mxu0
    %s501 = scalar_lea.vmem [#allocation6], 40
    %v502 = vld [vmem:[%s501] sm:$0xff]
    %v503 = vadd.f32 %v502, %v498
    %v504 = vtanh.pop %v503
    %505 = vmatprep.subr.mxu0 0.0
    %506 = vmatpush1.msra.mxu0 %v61
    %507 = vmatprep.subr.mxu0 0.0
    %508 = vmatpush1.msra.mxu0 %v60
    %509 = vmatprep.subr.mxu0 0.0
    %510 = vmatpush1.msra.mxu0 %v59
    %511 = vmatprep.subr.mxu0 0.0
    %512 = vmatpush1.msra.mxu0 %v58
    %513 = vmatprep.subr.mxu0 0.0
    %514 = vmatpush1.msra.mxu0 %v57
    %515 = vmatprep.subr.mxu0 0.0
    %516 = vmatpush1.msra.mxu0 %v56
    %517 = vmatprep.subr.mxu0 0.0
    %518 = vmatpush1.msra.mxu0 %v55
    %519 = vmatprep.subr.mxu0 0.0
    %520 = vmatpush1.msra.mxu0 %v54
    %521 = vmatprep.subr.mxu0 0.0
    %522 = vmatpush1.msra.mxu0 %v53
    %523 = vmatprep.subr.mxu0 0.0
    %524 = vmatpush1.msra.mxu0 %v52
    %525 = vmatprep.subr.mxu0 0.0
    %526 = vmatpush1.msra.mxu0 %v51
    %527 = vmatprep.subr.mxu0 0.0
    %528 = vmatpush1.msra.mxu0 %v50
    %529 = vmatprep.subr.mxu0 0.0
    %530 = vmatpush1.msra.mxu0 %v49
    %531 = vmatprep.subr.mxu0 0.0
    %532 = vmatpush1.msra.mxu0 %v48
    %533 = vmatprep.subr.mxu0 0.0
    %534 = vmatpush1.msra.mxu0 %v47
    %535 = vmatprep.subr.mxu0 0.0
    %536 = vmatpush1.msra.mxu0 %v46
    %537 = vmatprep.subr.mxu0 0.0
    %538 = vmatpush2.msra.mxu0 0.0
    %539 = vmatprep.subr.mxu0 0.0
    %540 = vmatpush2.msra.mxu0 0.0
    %541 = vmatprep.subr.mxu0 0.0
    %542 = vmatpush2.msra.mxu0 0.0
    %543 = vmatprep.subr.mxu0 0.0
    %544 = vmatpush2.msra.mxu0 0.0
    %545 = vmatprep.subr.mxu0 0.0
    %546 = vmatpush2.msra.mxu0 0.0
    %547 = vmatprep.subr.mxu0 0.0
    %548 = vmatpush2.msra.mxu0 0.0
    %549 = vmatprep.subr.mxu0 0.0
    %550 = vmatpush2.msra.mxu0 0.0
    %551 = vmatprep.subr.mxu0 0.0
    %552 = vmatpush2.msra.mxu0 0.0
    %553 = vmatprep.subr.mxu0 0.0
    %554 = vmatpush2.msra.mxu0 0.0
    %555 = vmatprep.subr.mxu0 0.0
    %556 = vmatpush2.msra.mxu0 0.0
    %557 = vmatprep.subr.mxu0 0.0
    %558 = vmatpush2.msra.mxu0 0.0
    %559 = vmatprep.subr.mxu0 0.0
    %560 = vmatpush2.msra.mxu0 0.0
    %561 = vmatprep.subr.mxu0 0.0
    %562 = vmatpush2.msra.mxu0 0.0
    %563 = vmatprep.subr.mxu0 0.0
    %564 = vmatpush2.msra.mxu0 0.0
    %565 = vmatprep.subr.mxu0 0.0
    %566 = vmatpush2.msra.mxu0 0.0
    %567 = vmatprep.subr.mxu0 0.0
    %568 = vmatpush2.msra.mxu0 0.0
    %569 = vmatprep.mubr.f32.mxu0 0.0
    %570 = vmatmul.mubr.f32.gmra.mxu0 %v504
    %v571 = vpop.f32.mrf.mxu0
    %v572 = vadd.f32 0.0, %v571
    %v573 = vpop.f32.mrf.mxu0
    %574 = vdwg.mxu0
    %s575 = scalar_lea.vmem [#allocation6], 48
    %v576 = vld [vmem:[%s575] sm:$0xff]
    %v577 = vadd.f32 %v576, %v572
    %v578 = vtanh.pop %v577
    %579 = vmatprep.subr.mxu0 0.0
    %580 = vmatpush1.msra.mxu0 %v61
    %581 = vmatprep.subr.mxu0 0.0
    %582 = vmatpush1.msra.mxu0 %v60
    %583 = vmatprep.subr.mxu0 0.0
    %584 = vmatpush1.msra.mxu0 %v59
    %585 = vmatprep.subr.mxu0 0.0
    %586 = vmatpush1.msra.mxu0 %v58
    %587 = vmatprep.subr.mxu0 0.0
    %588 = vmatpush1.msra.mxu0 %v57
    %589 = vmatprep.subr.mxu0 0.0
    %590 = vmatpush1.msra.mxu0 %v56
    %591 = vmatprep.subr.mxu0 0.0
    %592 = vmatpush1.msra.mxu0 %v55
    %593 = vmatprep.subr.mxu0 0.0
    %594 = vmatpush1.msra.mxu0 %v54
    %595 = vmatprep.subr.mxu0 0.0
    %596 = vmatpush1.msra.mxu0 %v53
    %597 = vmatprep.subr.mxu0 0.0
    %598 = vmatpush1.msra.mxu0 %v52
    %599 = vmatprep.subr.mxu0 0.0
    %600 = vmatpush1.msra.mxu0 %v51
    %601 = vmatprep.subr.mxu0 0.0
    %602 = vmatpush1.msra.mxu0 %v50
    %603 = vmatprep.subr.mxu0 0.0
    %604 = vmatpush1.msra.mxu0 %v49
    %605 = vmatprep.subr.mxu0 0.0
    %606 = vmatpush1.msra.mxu0 %v48
    %607 = vmatprep.subr.mxu0 0.0
    %608 = vmatpush1.msra.mxu0 %v47
    %609 = vmatprep.subr.mxu0 0.0
    %610 = vmatpush1.msra.mxu0 %v46
    %611 = vmatprep.subr.mxu0 0.0
    %612 = vmatpush2.msra.mxu0 0.0
    %613 = vmatprep.subr.mxu0 0.0
    %614 = vmatpush2.msra.mxu0 0.0
    %615 = vmatprep.subr.mxu0 0.0
    %616 = vmatpush2.msra.mxu0 0.0
    %617 = vmatprep.subr.mxu0 0.0
    %618 = vmatpush2.msra.mxu0 0.0
    %619 = vmatprep.subr.mxu0 0.0
    %620 = vmatpush2.msra.mxu0 0.0
    %621 = vmatprep.subr.mxu0 0.0
    %622 = vmatpush2.msra.mxu0 0.0
    %623 = vmatprep.subr.mxu0 0.0
    %624 = vmatpush2.msra.mxu0 0.0
    %625 = vmatprep.subr.mxu0 0.0
    %626 = vmatpush2.msra.mxu0 0.0
    %627 = vmatprep.subr.mxu0 0.0
    %628 = vmatpush2.msra.mxu0 0.0
    %629 = vmatprep.subr.mxu0 0.0
    %630 = vmatpush2.msra.mxu0 0.0
    %631 = vmatprep.subr.mxu0 0.0
    %632 = vmatpush2.msra.mxu0 0.0
    %633 = vmatprep.subr.mxu0 0.0
    %634 = vmatpush2.msra.mxu0 0.0
    %635 = vmatprep.subr.mxu0 0.0
    %636 = vmatpush2.msra.mxu0 0.0
    %637 = vmatprep.subr.mxu0 0.0
    %638 = vmatpush2.msra.mxu0 0.0
    %639 = vmatprep.subr.mxu0 0.0
    %640 = vmatpush2.msra.mxu0 0.0
    %641 = vmatprep.subr.mxu0 0.0
    %642 = vmatpush2.msra.mxu0 0.0
    %643 = vmatprep.mubr.f32.mxu0 0.0
    %644 = vmatmul.mubr.f32.gmra.mxu0 %v578
    %v645 = vpop.f32.mrf.mxu0
    %v646 = vadd.f32 0.0, %v645
    %v647 = vpop.f32.mrf.mxu0
    %648 = vdwg.mxu0
    %s649 = scalar_lea.vmem [#allocation6], 56
    %v650 = vld [vmem:[%s649] sm:$0xff]
    %v651 = vadd.f32 %v650, %v646
    %v652 = vtanh.pop %v651
    %653 = vst [vmem:[#allocation2] sm:$0xff] %v652
    // Predicated region
    $region22: #{tpu_custom_call.1} parent=1 // pred_check
      %p654 = pneg %p40
    $region23: #{tpu_custom_call.1} parent=1 // pred_check_branch
      %656 = sbr.rel (%p654) target = $region25
    $region24: #{tpu_custom_call.1} parent=1 // pred_region
      %657 = vst [vmem:[#allocation8] sm:$0xff] %v652
    $region25: #{tpu_custom_call.1} parent=1 // pred_fallthru
      _
    // Predicated region
    $region26: #{tpu_custom_call.1} parent=1 // pred_check
      _
    $region27: #{tpu_custom_call.1} parent=1 // pred_check_branch
      %659 = sbr.rel (0) target = $region29
    $region28: #{tpu_custom_call.1} parent=1 // pred_region
      %s661 = ssub.s32 128, 128
      %662 = vsyncadd [#allocation5], %s661
      %s664 = sshll.u32 [#allocation8], 4
      %s665 = int_to_ptr.vmem [resolvable:$true] %s664
      %667 = dma.vmem_to_hbm [thread:$0]  %s665, 128, %s2, [#allocation5]
    $region29: #{tpu_custom_call.1} parent=1 // pred_fallthru
      _
    // Predicated region
    $region30: #{tpu_custom_call.1} parent=1 // pred_check
      _
    $region31: #{tpu_custom_call.1} parent=1 // pred_check_branch
      %669 = sbr.rel (0) target = $region33
    $region32: #{tpu_custom_call.1} parent=1 // pred_region
      %670 = dma.done [#allocation5], 128
    $region33: #{tpu_custom_call.1} parent=1 // pred_fallthru
      _
    %671 = vsyncpa [#allocation4], 1
    %672 = vsyncpa [#allocation7], 1
    %673 = vsyncpa [#allocation5], 1

</llo_original>
